<compile_context>
chip_gen: v7x
topology: tpu7x:2x2x1
jax: 0.10.0
libtpu: 0.0.40
codegen_flags: <defaults>
</compile_context>

<pallas_src>
import jax
import jax.numpy as jnp
from jax.experimental import pallas as pl
from jax.experimental.pallas import tpu as pltpu


def _softplus(z):
    # numerically stable softplus(z) = log(1 + exp(z))
    return jnp.maximum(z, 0.0) + jnp.log1p(jnp.exp(-jnp.abs(z)))


def _partials_kernel(gt_ref, x_ref, out_ref):
    # gt_ref : (1, T, 128)        integer labels in [0, C]   (T % 8 == 0)
    # x_ref  : (1, 1, T, 128)     logits of channel c = program_id(2)
    # out_ref: (1, 1, 1, 24, 128) three (8,128) VPU-only partial sums:
    #   rows  0.. 7 : sum of softplus(-x) over positive pixels
    #   rows  8..15 : sum of softplus(x)  over negative pixels
    #   rows 16..23 : number of positive pixels
    c = pl.program_id(2)
    T = x_ref.shape[2]
    L = x_ref.shape[3]

    x = x_ref[0, 0].astype(jnp.float32)            # (T, L)
    gt = gt_ref[0].astype(jnp.int32)               # (T, L)
    pos = gt == c + 1                              # gt_masks == i + 1

    sp = _softplus(x)                              # softplus(x); softplus(-x) = sp - x

    pos_term = jnp.where(pos, sp - x, 0.0)         # softplus(-x) on positives
    neg_term = jnp.where(pos, 0.0, sp)             # softplus(x)  on negatives
    pos_f = jnp.where(pos, 1.0, 0.0)

    def fold(a):
        # (T, L) -> (8, L) partial via pure vreg adds (no cross-lane XLU work).
        return a.reshape(T // 8, 8, L).sum(axis=0)

    out_ref[0, 0, 0, 0:8, :] = fold(pos_term)
    out_ref[0, 0, 0, 8:16, :] = fold(neg_term)
    out_ref[0, 0, 0, 16:24, :] = fold(pos_f)


def _choose_tile_rows(n_rows, max_rows=2048):
    """Largest multiple-of-8 divisor of n_rows that is <= max_rows.

    n_rows is always a multiple of 8 (HW is padded to a multiple of 8*128),
    so a valid divisor (at worst 8) always exists.
    """
    if n_rows <= max_rows:
        return n_rows
    t = max_rows - (max_rows % 8)
    while t >= 8:
        if n_rows % t == 0:
            return t
        t -= 8
    return 8


def joint_seg_loss(skls, masks, gt_masks, alpha=0.2):
    B, C, H, W = masks.shape
    HW = H * W

    # Bounding boxes from skeletons -- present in the reference forward but
    # never used by the returned loss (kept for semantic fidelity; XLA DCEs it).
    y_mins = jnp.clip(jnp.min(skls[:, :, 1], axis=1).astype(jnp.int32) - 10, 0)
    y_maxs = jnp.clip(jnp.max(skls[:, :, 1], axis=1).astype(jnp.int32) + 10, None, H)
    x_mins = jnp.clip(jnp.min(skls[:, :, 0], axis=1).astype(jnp.int32) - 10, 0)
    x_maxs = jnp.clip(jnp.max(skls[:, :, 0], axis=1).astype(jnp.int32) + 10, None, W)
    del y_mins, y_maxs, x_mins, x_maxs  # unused, exactly as in the PyTorch module

    # Flatten the spatial axis and pad it to a multiple of 8*128 so every block
    # is sublane/lane dense.  Padding uses neutral values (logits -> -1e30 so
    # softplus == 0 exactly; labels -> 0 so no class matches) => no in-kernel
    # tail masking required.  When HW % 1024 == 0 this is a metadata-only
    # reshape (no copy).
    GRAN = 8 * 128
    HW_pad = ((HW + GRAN - 1) // GRAN) * GRAN
    lanes = 128
    n_rows = HW_pad // lanes

    x = masks.reshape(B, C, HW)        # keep producer dtype (bf16 OK); cast in-kernel
    gt = gt_masks.reshape(B, HW)       # keep producer dtype (int8 OK); cast in-kernel
    if HW_pad != HW:
        x = jnp.pad(x, ((0, 0), (0, 0), (0, HW_pad - HW)), constant_values=-1e30)
        gt = jnp.pad(gt, ((0, 0), (0, HW_pad - HW)), constant_values=0)
    x = x.reshape(B, C, n_rows, lanes)
    gt = gt.reshape(B, n_rows, lanes)

    tile_rows = _choose_tile_rows(n_rows)
    n_tiles = n_rows // tile_rows

    # TODO(synk): if a profile shows exposed DMA on the logits stream at these
    # tile sizes, add pipeline_mode=pl.Buffered(3) to the x BlockSpec.
    partials = pl.pallas_call(
        _partials_kernel,
        out_shape=jax.ShapeDtypeStruct((B, n_tiles, C, 24, 128), jnp.float32),
        grid_spec=pltpu.PrefetchScalarGridSpec(
            num_scalar_prefetch=0,
            grid=(B, n_tiles, C),
            in_specs=[
                # gt tile: index_map independent of c -> fetched once per (b, t),
                # reused across the innermost channel loop.
                pl.BlockSpec((1, tile_rows, lanes), lambda b, t, c: (b, t, 0)),
                # one channel / one spatial tile of logits, natural layout.
                pl.BlockSpec((1, 1, tile_rows, lanes), lambda b, t, c: (b, c, t, 0)),
            ],
            out_specs=pl.BlockSpec(
                (1, 1, 1, 24, 128), lambda b, t, c: (b, t, c, 0, 0)),
        ),
        compiler_params=pltpu.CompilerParams(
            # B / spatial-tile axes are megacore-shardable; keep the channel
            # axis in-order per core so gt-block reuse is preserved.
            dimension_semantics=("parallel", "parallel", "arbitrary"),
            vmem_limit_bytes=32 * 1024 * 1024),
    )(gt, x)

    # Tiny final reduction (per-channel) in plain XLA.
    per_ch = jnp.sum(partials, axis=(0, 1, 4))          # (C, 24)
    pos_num = jnp.sum(per_ch[:, 0:8], axis=1)           # sum softplus(-x) over positives
    neg_num = jnp.sum(per_ch[:, 8:16], axis=1)           # sum softplus(x)  over negatives
    pos_cnt = jnp.sum(per_ch[:, 16:24], axis=1)          # number of positives
    neg_cnt = float(B * HW) - pos_cnt

    # NOTE: a channel with zero positive pixels yields NaN (division by zero),
    # matching the PyTorch module's behaviour (mean over an empty selection).
    pos_loss = pos_num / pos_cnt
    neg_loss = neg_num / neg_cnt
    return jnp.sum(alpha * pos_loss + neg_loss)


def joint_seg_loss_ref(skls, masks, gt_masks, alpha=0.2):
    # Pure-JAX reference mirroring the PyTorch forward (boolean-mask means).
    B, C, H, W = masks.shape
    loss = 0.0
    for i in range(C):
        pos = gt_masks == i + 1
        x = masks[:, i].astype(jnp.float32)
        pos_loss = jnp.sum(jnp.where(pos, _softplus(-x), 0.0)) / jnp.sum(pos)
        neg_loss = jnp.sum(jnp.where(pos, 0.0, _softplus(x))) / jnp.sum(~pos)
        loss = loss + alpha * pos_loss + neg_loss
    return loss


if __name__ == "__main__":
    key = jax.random.PRNGKey(0)
    k1, k2, k3 = jax.random.split(key, 3)

    B, C, H, W, K = 2, 4, 16, 16, 8
    masks = jax.random.normal(k1, (B, C, H, W), dtype=jnp.float32)        # logits
    gt_masks = jax.random.randint(k2, (B, H, W), 0, C + 1, dtype=jnp.int32)
    # guarantee every class 1..C has at least one positive pixel (else the mean
    # is NaN, same as the PyTorch module).
    gt_masks = gt_masks.at[0, 0, :C].set(jnp.arange(1, C + 1, dtype=jnp.int32))
    skls = jax.random.uniform(k3, (B, K, 2), minval=0.0, maxval=float(H))

    loss = joint_seg_loss(skls, masks, gt_masks, alpha=0.2)
    loss = jax.block_until_ready(loss)

    ref = joint_seg_loss_ref(skls, masks, gt_masks, alpha=0.2)
    assert jnp.allclose(loss, ref, rtol=1e-4, atol=1e-4), (loss, ref)
    print("KERNEL_OK")
</pallas_src>

<mosaic_0001>
module attributes {stable_mosaic.version = 11 : i64} {
  func.func @_partials_kernel(%arg0: i32, %arg1: i32, %arg2: i32, %arg3: memref<1x8x128xi32, #tpu.memory_space<vmem>>, %arg4: memref<1x1x8x128xf32, #tpu.memory_space<vmem>>, %arg5: memref<1x1x1x24x128xf32, #tpu.memory_space<vmem>>) attributes {dimension_semantics = [#tpu.dimension_semantics<parallel>, #tpu.dimension_semantics<parallel>, #tpu.dimension_semantics<arbitrary>], iteration_bounds = array<i64: 2, 1, 4>, scalar_prefetch = 0 : i64, scratch_operands = 0 : i64, tpu.core_type = #tpu.core_type<tc>, window_params = [{transform_indices = @transform_0, window_bounds = array<i64: 1, 8, 128>}, {transform_indices = @transform_1, window_bounds = array<i64: 1, 1, 8, 128>}, {transform_indices = @transform_2, window_bounds = array<i64: 1, 1, 1, 24, 128>}]} {
    %c0 = arith.constant 0 : index
    %c0_0 = arith.constant 0 : index
    %c0_1 = arith.constant 0 : index
    %c0_2 = arith.constant 0 : index
    %0 = vector.load %arg4[%c0, %c0_0, %c0_1, %c0_2] : memref<1x1x8x128xf32, #tpu.memory_space<vmem>>, vector<1x1x8x128xf32>
    %1 = vector.shape_cast %0 : vector<1x1x8x128xf32> to vector<8x128xf32>
    %c0_3 = arith.constant 0 : index
    %c0_4 = arith.constant 0 : index
    %c0_5 = arith.constant 0 : index
    %2 = vector.load %arg3[%c0_3, %c0_4, %c0_5] : memref<1x8x128xi32, #tpu.memory_space<vmem>>, vector<1x8x128xi32>
    %3 = vector.shape_cast %2 : vector<1x8x128xi32> to vector<8x128xi32>
    %c1_i32 = arith.constant 1 : i32
    %4 = arith.addi %arg2, %c1_i32 : i32
    %5 = vector.broadcast %4 : i32 to vector<8x128xi32>
    %6 = arith.cmpi eq, %3, %5 : vector<8x128xi32>
    %cst = arith.constant 0.000000e+00 : f32
    %7 = vector.broadcast %cst : f32 to vector<8x128xf32>
    %8 = arith.maximumf %1, %7 : vector<8x128xf32>
    %9 = math.absf %1 : vector<8x128xf32>
    %cst_6 = arith.constant 0.000000e+00 : f32
    %10 = vector.broadcast %cst_6 : f32 to vector<8x128xf32>
    %11 = arith.subf %10, %9 : vector<8x128xf32>
    %12 = math.exp %11 : vector<8x128xf32>
    %13 = math.log1p %12 : vector<8x128xf32>
    %14 = arith.addf %8, %13 : vector<8x128xf32>
    %15 = arith.subf %14, %1 : vector<8x128xf32>
    %cst_7 = arith.constant 0.000000e+00 : f32
    %16 = vector.broadcast %cst_7 : f32 to vector<8x128xf32>
    %17 = arith.select %6, %15, %16 : vector<8x128xi1>, vector<8x128xf32>
    %cst_8 = arith.constant 0.000000e+00 : f32
    %18 = vector.broadcast %cst_8 : f32 to vector<8x128xf32>
    %19 = arith.select %6, %18, %14 : vector<8x128xi1>, vector<8x128xf32>
    %cst_9 = arith.constant 1.000000e+00 : f32
    %cst_10 = arith.constant 0.000000e+00 : f32
    %20 = vector.broadcast %cst_9 : f32 to vector<8x128xf32>
    %21 = vector.broadcast %cst_10 : f32 to vector<8x128xf32>
    %22 = arith.select %6, %20, %21 : vector<8x128xi1>, vector<8x128xf32>
    %23 = vector.shape_cast %17 : vector<8x128xf32> to vector<1x8x128xf32>
    %cst_11 = arith.constant dense<0.000000e+00> : vector<8x128xf32>
    %24 = vector.multi_reduction <add>, %23, %cst_11 [0] : vector<1x8x128xf32> to vector<8x128xf32>
    %c0_12 = arith.constant 0 : index
    %c0_13 = arith.constant 0 : index
    %c0_14 = arith.constant 0 : index
    %c0_15 = arith.constant 0 : index
    %c0_16 = arith.constant 0 : index
    %25 = vector.load %arg5[%c0_12, %c0_13, %c0_14, %c0_15, %c0_16] : memref<1x1x1x24x128xf32, #tpu.memory_space<vmem>>, vector<1x1x1x8x128xf32>
    %26 = vector.shape_cast %25 : vector<1x1x1x8x128xf32> to vector<8x128xf32>
    %27 = vector.shape_cast %24 : vector<8x128xf32> to vector<1x1x1x8x128xf32>
    tpu.vector_store %arg5[%c0_12, %c0_13, %c0_14, %c0_15, %c0_16], %27 {strides = array<i32>} : memref<1x1x1x24x128xf32, #tpu.memory_space<vmem>>, vector<1x1x1x8x128xf32>,
    %28 = vector.shape_cast %19 : vector<8x128xf32> to vector<1x8x128xf32>
    %cst_17 = arith.constant dense<0.000000e+00> : vector<8x128xf32>
    %29 = vector.multi_reduction <add>, %28, %cst_17 [0] : vector<1x8x128xf32> to vector<8x128xf32>
    %c0_18 = arith.constant 0 : index
    %c0_19 = arith.constant 0 : index
    %c0_20 = arith.constant 0 : index
    %c8 = arith.constant 8 : index
    %c0_21 = arith.constant 0 : index
    %30 = vector.load %arg5[%c0_18, %c0_19, %c0_20, %c8, %c0_21] : memref<1x1x1x24x128xf32, #tpu.memory_space<vmem>>, vector<1x1x1x8x128xf32>
    %31 = vector.shape_cast %30 : vector<1x1x1x8x128xf32> to vector<8x128xf32>
    %32 = vector.shape_cast %29 : vector<8x128xf32> to vector<1x1x1x8x128xf32>
    tpu.vector_store %arg5[%c0_18, %c0_19, %c0_20, %c8, %c0_21], %32 {strides = array<i32>} : memref<1x1x1x24x128xf32, #tpu.memory_space<vmem>>, vector<1x1x1x8x128xf32>,
    %33 = vector.shape_cast %22 : vector<8x128xf32> to vector<1x8x128xf32>
    %cst_22 = arith.constant dense<0.000000e+00> : vector<8x128xf32>
    %34 = vector.multi_reduction <add>, %33, %cst_22 [0] : vector<1x8x128xf32> to vector<8x128xf32>
    %c0_23 = arith.constant 0 : index
    %c0_24 = arith.constant 0 : index
    %c0_25 = arith.constant 0 : index
    %c16 = arith.constant 16 : index
    %c0_26 = arith.constant 0 : index
    %35 = vector.load %arg5[%c0_23, %c0_24, %c0_25, %c16, %c0_26] : memref<1x1x1x24x128xf32, #tpu.memory_space<vmem>>, vector<1x1x1x8x128xf32>
    %36 = vector.shape_cast %35 : vector<1x1x1x8x128xf32> to vector<8x128xf32>
    %37 = vector.shape_cast %34 : vector<8x128xf32> to vector<1x1x1x8x128xf32>
    tpu.vector_store %arg5[%c0_23, %c0_24, %c0_25, %c16, %c0_26], %37 {strides = array<i32>} : memref<1x1x1x24x128xf32, #tpu.memory_space<vmem>>, vector<1x1x1x8x128xf32>,
    return
  }
  func.func @transform_0(%arg0: i32, %arg1: i32, %arg2: i32) -> (i32, i32, i32) {
    %c0_i32 = arith.constant 0 : i32
    %c0_i32_0 = arith.constant 0 : i32
    return %arg0, %arg1, %c0_i32 : i32, i32, i32
  }
  func.func @transform_1(%arg0: i32, %arg1: i32, %arg2: i32) -> (i32, i32, i32, i32) {
    %c0_i32 = arith.constant 0 : i32
    %c0_i32_0 = arith.constant 0 : i32
    return %arg0, %arg2, %arg1, %c0_i32 : i32, i32, i32, i32
  }
  func.func @transform_2(%arg0: i32, %arg1: i32, %arg2: i32) -> (i32, i32, i32, i32, i32) {
    %c0_i32 = arith.constant 0 : i32
    %c0_i32_0 = arith.constant 0 : i32
    %c0_i32_1 = arith.constant 0 : i32
    return %arg0, %arg1, %arg2, %c0_i32, %c0_i32_0 : i32, i32, i32, i32, i32
  }
}

</mosaic_0001>

<llo_original>
// kernel: tpu_custom_call.1
$region0: #{tpu_custom_call.1}
  #allocation0 [shape = 'u32[]', space=smem, size = 0x4, offset = 0x4, fixed_abs, tag = 'smem constant byte address 0x4 - core index']
  #allocation1 [shape = 'u32[144,128]{1,0:T(1,128)}', space=vmem, size = 0x12000, scoped, tag = 'internal scratch']
  %s0 = inlined_call_operand.hbm [shape: s32[2,8,128], index: 0, kind: input, shape index: {}]
  %s1 = inlined_call_operand.hbm [shape: f32[2,4,8,128], index: 1, kind: input, shape index: {}]
  %s2 = inlined_call_operand.hbm [shape: f32[2,1,4,24,128], index: 2, kind: output, shape index: {}]
  %s3 = sld [smem:[#allocation0]]
  $region49: #{tpu_custom_call.1} parent=0
    _
  %s5 = ssub.s32 1, %s3
  %s6 = scalar_select 0, %s5, %s3
  $region1: #{tpu_custom_call.1} parent=0
    #allocation2 [shape = 'u8[8192]{0}', space=vmem, size = 0x2000, scoped, tag = 'input window, operand 0']
    #allocation3 [shape = 's32[2]{0}', space=sflag, size = 0x8, scoped, tag = 'scoped memory for tpu_custom_call.1']
    #allocation4 [shape = 's32[2]{0}', space=sflag, size = 0x8, scoped, tag = 'scoped memory for tpu_custom_call.1']
    #allocation5 [shape = 'u8[8192]{0}', space=vmem, size = 0x2000, scoped, tag = 'input window, operand 1']
    #allocation6 [shape = 's32[2]{0}', space=sflag, size = 0x8, scoped, tag = 'scoped memory for tpu_custom_call.1']
    #allocation7 [shape = 'u8[24576]{0}', space=vmem, size = 0x6000, scoped, tag = 'output window, operand 0']
    %7 = vsyncpa [#allocation3], 0
    %s8 = scalar_lea.sflag [#allocation3], 1
    %9 = vsyncpa %s8, 0
    %10 = vsyncpa [#allocation6], 0
    %s11 = scalar_lea.sflag [#allocation6], 1
    %12 = vsyncpa %s11, 0
    %13 = vsyncpa [#allocation4], 0
    %s14 = scalar_lea.sflag [#allocation4], 1
    %15 = vsyncpa %s14, 0
    loop: start=0, step=1, limit=10
    $region2: #{tpu_custom_call.1} parent=1 // loop_pre_header
      _
    $region3: #{tpu_custom_call.1} parent=1 // loop_header
      %s17 = sphi 0, %s21
      %p18 = scmp.ge.s32.totalorder %s17, 10
      %s24 = sphi 0, %s43
      %s25 = sphi 0, %s39
      %s26 = sphi 0, %s35
      %s27 = sphi 0, %s24
      %s28 = sphi 0, %s25
      %s29 = sphi 0, %s26
      %s30 = sphi 0, %s27
      %s31 = sphi 0, %s28
      %s32 = sphi 0, %s29
      %s48 = sphi 0, %s50
      %s51 = sphi 0, %s48
      %s52 = sphi 0, %s51
      %s68 = sphi 0, %s52
      %s78 = sphi 0, %s80
      %s81 = sphi 0, %s78
      %s82 = sphi 0, %s81
      %s98 = sphi 0, %s82
      %s108 = sphi 0, %s110
      %s111 = sphi 0, %s108
      %s112 = sphi 0, %s111
      %s128 = sphi 0, %s112
    $region4: #{tpu_custom_call.1} parent=1 // loop_header_branch
      %20 = sbr.rel (%p18) target = $region8
    $region5: #{tpu_custom_call.1} parent=1 // loop_body
      %s22 = ssub.s32 %s17, 1
      %s23 = ssub.s32 %s17, 2
      %s33 = sadd.s32 1, %s26
      %p34 = scmp.ge.s32.totalorder %s33, 4
      %s35 = scalar_select %p34, 0, %s33
      %s36 = sadd.s32 1, %s25
      %s37 = scalar_select %p34, %s36, %s25
      %p38 = scmp.ge.s32.totalorder %s37, 1
      %s39 = scalar_select %p38, 0, %s37
      %s40 = sadd.s32 1, %s24
      %s41 = scalar_select %p38, %s40, %s24
      %p42 = scmp.ge.s32.totalorder %s41, 2
      %s43 = scalar_select %p42, 0, %s41
      %s44 = ssub.s32 %s24, %s43
      %s45 = ssub.s32 %s25, %s39
      %s46 = sor.u32 %s44, %s45
      %p47 = scmp.eq.s32.totalorder %s46, 0
      %s49 = sadd.s32 %s48, 1
      %s50 = scalar_select %p47, %s48, %s49
      %p53 = pneg %p47
      %p54 = scmp.eq.s32.totalorder %s17, 7
      %p55 = por %p53, %p54
      %p56 = scmp.ne.s32.totalorder %s48, %s51
      %p57 = scmp.eq.s32.totalorder %s17, 0
      %p58 = por %p56, %p57
      %p59 = scmp.ne.s32.totalorder %s48, %s51
      %p60 = scmp.eq.s32.totalorder %s22, 7
      %p61 = por %p59, %p60
      %p62 = scmp.ne.s32.totalorder %s51, %s52
      %p63 = scmp.eq.s32.totalorder %s22, 0
      %p64 = por %p62, %p63
      %p65 = scmp.ne.s32.totalorder %s51, %s52
      %p66 = scmp.eq.s32.totalorder %s23, 7
      %p67 = por %p65, %p66
      %p69 = scmp.ne.s32.totalorder %s52, %s68
      %p70 = scmp.eq.s32.totalorder %s23, 0
      %p71 = por %p69, %p70
      %s72 = ssub.s32 %s24, %s43
      %s73 = ssub.s32 %s26, %s35
      %s74 = sor.u32 %s72, %s73
      %s75 = ssub.s32 %s25, %s39
      %s76 = sor.u32 %s74, %s75
      %p77 = scmp.eq.s32.totalorder %s76, 0
      %s79 = sadd.s32 %s78, 1
      %s80 = scalar_select %p77, %s78, %s79
      %p83 = pneg %p77
      %p84 = scmp.eq.s32.totalorder %s17, 7
      %p85 = por %p83, %p84
      %p86 = scmp.ne.s32.totalorder %s78, %s81
      %p87 = scmp.eq.s32.totalorder %s17, 0
      %p88 = por %p86, %p87
      %p89 = scmp.ne.s32.totalorder %s78, %s81
      %p90 = scmp.eq.s32.totalorder %s22, 7
      %p91 = por %p89, %p90
      %p92 = scmp.ne.s32.totalorder %s81, %s82
      %p93 = scmp.eq.s32.totalorder %s22, 0
      %p94 = por %p92, %p93
      %p95 = scmp.ne.s32.totalorder %s81, %s82
      %p96 = scmp.eq.s32.totalorder %s23, 7
      %p97 = por %p95, %p96
      %p99 = scmp.ne.s32.totalorder %s82, %s98
      %p100 = scmp.eq.s32.totalorder %s23, 0
      %p101 = por %p99, %p100
      %s102 = ssub.s32 %s24, %s43
      %s103 = ssub.s32 %s25, %s39
      %s104 = sor.u32 %s102, %s103
      %s105 = ssub.s32 %s26, %s35
      %s106 = sor.u32 %s104, %s105
      %p107 = scmp.eq.s32.totalorder %s106, 0
      %s109 = sadd.s32 %s108, 1
      %s110 = scalar_select %p107, %s108, %s109
      %p113 = pneg %p107
      %p114 = scmp.eq.s32.totalorder %s17, 7
      %p115 = por %p113, %p114
      %p116 = scmp.ne.s32.totalorder %s108, %s111
      %p117 = scmp.eq.s32.totalorder %s17, 0
      %p118 = por %p116, %p117
      %p119 = scmp.ne.s32.totalorder %s108, %s111
      %p120 = scmp.eq.s32.totalorder %s22, 7
      %p121 = por %p119, %p120
      %p122 = scmp.ne.s32.totalorder %s111, %s112
      %p123 = scmp.eq.s32.totalorder %s22, 0
      %p124 = por %p122, %p123
      %p125 = scmp.ne.s32.totalorder %s111, %s112
      %p126 = scmp.eq.s32.totalorder %s23, 7
      %p127 = por %p125, %p126
      %p129 = scmp.ne.s32.totalorder %s112, %s128
      %p130 = scmp.eq.s32.totalorder %s23, 0
      %p131 = por %p129, %p130
      %p132 = scmp.le.s32.totalorder 1, %s17
      %p133 = scmp.lt.s32.totalorder %s17, 9
      %p134 = pnand %p132, %p133
      %p135 = pneg %p134
      // Predicated region
      $region9: #{tpu_custom_call.1} parent=5 // pred_check
        _
      $region10: #{tpu_custom_call.1} parent=5 // pred_check_branch
        %137 = sbr.rel (%p134) target = $region12
      $region11: #{tpu_custom_call.1} parent=5 // pred_region
        %s138 = ssub.s32 %s17, 1
      $region12: #{tpu_custom_call.1} parent=5 // pred_fallthru
        _
      %p139 = scmp.lt.s32.totalorder %s17, 8
      // Predicated region
      $region13: #{tpu_custom_call.1} parent=5 // pred_check
        %p140 = pneg %p139
      $region14: #{tpu_custom_call.1} parent=5 // pred_check_branch
        %142 = sbr.rel (%p140) target = $region16
      $region15: #{tpu_custom_call.1} parent=5 // pred_region
        // Predicated region
        $region17: #{tpu_custom_call.1} parent=15 // pred_check
          %p143 = pneg %p58
        $region18: #{tpu_custom_call.1} parent=15 // pred_check_branch
          %145 = sbr.rel (%p143) target = $region20
        $region19: #{tpu_custom_call.1} parent=15 // pred_region
          %s146 = sand.u32 %s48, 1
          %s147 = scalar_lea.sflag [#allocation3], %s146
          %s148 = sand.u32 %s48, 1
          %s149 = smul.addr %s148, 8
          %s150 = scalar_lea.vmem [#allocation2], %s149
          %s152 = ssub.s32 128, 128
          %153 = vsyncadd %s147, %s152
          %s154 = sadd.s32 %s25, %s24
          %s155 = smul.addr %s154, 128
          %s156 = scalar_lea.hbm %s0, %s155
          %s158 = sshll.u32 %s150, 4
          %s159 = int_to_ptr.vmem [resolvable:$true] %s158
          %161 = dma.hbm_to_vmem [thread:$0]  %s156, 128, %s159, %s147
        $region20: #{tpu_custom_call.1} parent=15 // pred_fallthru
          _
        // Predicated region
        $region21: #{tpu_custom_call.1} parent=15 // pred_check
          %p162 = pneg %p88
        $region22: #{tpu_custom_call.1} parent=15 // pred_check_branch
          %164 = sbr.rel (%p162) target = $region24
        $region23: #{tpu_custom_call.1} parent=15 // pred_region
          %s165 = sand.u32 %s78, 1
          %s166 = scalar_lea.sflag [#allocation6], %s165
          %s167 = sand.u32 %s78, 1
          %s168 = smul.addr %s167, 8
          %s169 = scalar_lea.vmem [#allocation5], %s168
          %s171 = ssub.s32 128, 128
          %172 = vsyncadd %s166, %s171
          %s173 = sadd.s32 %s25, %s26
          %s174 = smul.addr %s24, 4
          %s175 = sadd.s32 %s173, %s174
          %s176 = smul.addr %s175, 128
          %s177 = scalar_lea.hbm %s1, %s176
          %s179 = sshll.u32 %s169, 4
          %s180 = int_to_ptr.vmem [resolvable:$true] %s179
          %182 = dma.hbm_to_vmem [thread:$0]  %s177, 128, %s180, %s166
        $region24: #{tpu_custom_call.1} parent=15 // pred_fallthru
          _
      $region16: #{tpu_custom_call.1} parent=5 // pred_fallthru
        _
      %p183 = scmp.le.s32.totalorder 1, %s17
      %p184 = scmp.lt.s32.totalorder %s17, 9
      %p185 = pnand %p183, %p184
      %p186 = pneg %p185
      // Predicated region
      $region25: #{tpu_custom_call.1} parent=5 // pred_check
        _
      $region26: #{tpu_custom_call.1} parent=5 // pred_check_branch
        %188 = sbr.rel (%p185) target = $region28
      $region27: #{tpu_custom_call.1} parent=5 // pred_region
        %s189 = ssub.s32 %s17, 1
        %s190 = sand.u32 %s51, 1
        %s191 = scalar_lea.sflag [#allocation3], %s190
        %s192 = sand.u32 %s51, 1
        %s193 = smul.addr %s192, 8
        %s194 = scalar_lea.vmem [#allocation2], %s193
        // Predicated region
        $region29: #{tpu_custom_call.1} parent=27 // pred_check
          %p195 = pneg %p64
        $region30: #{tpu_custom_call.1} parent=27 // pred_check_branch
          %197 = sbr.rel (%p195) target = $region32
        $region31: #{tpu_custom_call.1} parent=27 // pred_region
          %198 = dma.done %s191, 128
        $region32: #{tpu_custom_call.1} parent=27 // pred_fallthru
          _
        %s199 = sand.u32 %s81, 1
        %s200 = scalar_lea.sflag [#allocation6], %s199
        %s201 = sand.u32 %s81, 1
        %s202 = smul.addr %s201, 8
        %s203 = scalar_lea.vmem [#allocation5], %s202
        // Predicated region
        $region33: #{tpu_custom_call.1} parent=27 // pred_check
          %p204 = pneg %p94
        $region34: #{tpu_custom_call.1} parent=27 // pred_check_branch
          %206 = sbr.rel (%p204) target = $region36
        $region35: #{tpu_custom_call.1} parent=27 // pred_region
          %207 = dma.done %s200, 128
        $region36: #{tpu_custom_call.1} parent=27 // pred_fallthru
          _
        %s208 = sand.u32 %s51, 1
        %s209 = scalar_lea.sflag [#allocation3], %s208
        %s210 = sand.u32 %s51, 1
        %s211 = smul.addr %s210, 8
        %s212 = scalar_lea.vmem [#allocation2], %s211
        %p213 = pneg %p64
        %p214 = pneg %p61
        %s215 = sand.u32 %s81, 1
        %s216 = scalar_lea.sflag [#allocation6], %s215
        %s217 = sand.u32 %s81, 1
        %s218 = smul.addr %s217, 8
        %s219 = scalar_lea.vmem [#allocation5], %s218
        %p220 = pneg %p94
        %p221 = pneg %p91
        %p222 = pneg %p124
        %p223 = pneg %p121
        %s224 = sand.u32 %s111, 1
        %s225 = scalar_lea.sflag [#allocation4], %s224
        %s226 = sand.u32 %s111, 1
        %s227 = smul.addr %s226, 24
        %s228 = scalar_lea.vmem [#allocation7], %s227
        %v229 = vld [vmem:[%s203] sm:$0xff]
        %v230 = vld [vmem:[%s194] sm:$0xff]
        %s231 = sadd.s32 %s29, 1
        %v232 = vstv %s231
        %vm233 = vcmp.eq.s32.totalorder %v230, %v232
        %v234 = vmax.f32 %v229, 0.0
        %v235 = vand.u32 2147483647, %v229
        %v236 = vsub.f32 0.0, %v235
        %v237 = vmul.f32 %v236, 1.442695
        %v238 = vpow.pop %v237
        %v239 = vadd.f32 %v238, 1.0
        %v240 = vlog2.pop %v239
        %v241 = vmul.f32 %v240, 0.6931472
        %v242 = vmul.f32 -0.5, %v238
        %v243 = vadd.f32 %v242, 1.0
        %v244 = vmul.f32 %v243, %v238
        %v245 = vand.u32 2147483647, %v238
        %vm246 = vcmp.lt.f32.partialorder %v245, 0.0004427343
        %v247 = vsel %vm246, %v244, %v241
        %v248 = vadd.f32 %v234, %v247
        %v249 = vsub.f32 %v248, %v229
        %v250 = vsel %vm233, %v249, 0.0
        %v251 = vsel %vm233, 0.0, %v248
        %v252 = vsel %vm233, 1.0, 0.0
        %v253 = vadd.f32 %v250, 0.0
        %254 = vst [vmem:[%s228] sm:$0xff] %v253
        %v255 = vadd.f32 %v251, 0.0
        %256 = vst [vmem:[%s228 + $0x8] sm:$0xff] %v255
        %v257 = vadd.f32 %v252, 0.0
        %258 = vst [vmem:[%s228 + $0x10] sm:$0xff] %v257
        %s259 = sand.u32 %s111, 1
        %s260 = scalar_lea.sflag [#allocation4], %s259
        %s261 = sand.u32 %s111, 1
        %s262 = smul.addr %s261, 24
        %s263 = scalar_lea.vmem [#allocation7], %s262
        // Predicated region
        $region37: #{tpu_custom_call.1} parent=27 // pred_check
          %p264 = pneg %p121
        $region38: #{tpu_custom_call.1} parent=27 // pred_check_branch
          %266 = sbr.rel (%p264) target = $region40
        $region39: #{tpu_custom_call.1} parent=27 // pred_region
          %s268 = ssub.s32 384, 384
          %269 = vsyncadd %s260, %s268
          %s270 = smul.addr %s29, 3
          %s271 = smul.addr %s28, 12
          %s272 = sadd.s32 %s270, %s271
          %s273 = smul.addr %s27, 12
          %s274 = sadd.s32 %s272, %s273
          %s275 = smul.addr %s274, 128
          %s276 = scalar_lea.hbm %s2, %s275
          %s277 = sshll.u32 %s263, 4
          %s278 = int_to_ptr.vmem [resolvable:$true] %s277
          %283 = dma.vmem_to_hbm [thread:$0]  %s278, 384, %s276, %s260, 128, 128, 8
        $region40: #{tpu_custom_call.1} parent=27 // pred_fallthru
          _
      $region28: #{tpu_custom_call.1} parent=5 // pred_fallthru
        _
      %p284 = scmp.le.s32.totalorder 2, %s17
      // Predicated region
      $region41: #{tpu_custom_call.1} parent=5 // pred_check
        %p285 = pneg %p284
      $region42: #{tpu_custom_call.1} parent=5 // pred_check_branch
        %287 = sbr.rel (%p285) target = $region44
      $region43: #{tpu_custom_call.1} parent=5 // pred_region
        %s288 = ssub.s32 %s17, 2
        // Predicated region
        $region45: #{tpu_custom_call.1} parent=43 // pred_check
          %p289 = pneg %p127
        $region46: #{tpu_custom_call.1} parent=43 // pred_check_branch
          %291 = sbr.rel (%p289) target = $region48
        $region47: #{tpu_custom_call.1} parent=43 // pred_region
          %s292 = sand.u32 %s112, 1
          %s293 = scalar_lea.sflag [#allocation4], %s292
          %s294 = sand.u32 %s112, 1
          %s295 = smul.addr %s294, 24
          %s296 = scalar_lea.vmem [#allocation7], %s295
          %297 = dma.done %s293, 384
        $region48: #{tpu_custom_call.1} parent=43 // pred_fallthru
          _
      $region44: #{tpu_custom_call.1} parent=5 // pred_fallthru
        _
    $region6: #{tpu_custom_call.1} parent=1 // loop_footer
      %s21 = sadd.s32 1, %s17
    $region7: #{tpu_custom_call.1} parent=1 // loop_footer_branch
      %16 = sbr.rel target = $region3
    $region8: #{tpu_custom_call.1} parent=1 // loop_exit
      _
    %298 = vsyncpa [#allocation3], 1
    %s299 = scalar_lea.sflag [#allocation3], 1
    %300 = vsyncpa %s299, 1
    %301 = vsyncpa [#allocation6], 1
    %s302 = scalar_lea.sflag [#allocation6], 1
    %303 = vsyncpa %s302, 1
    %304 = vsyncpa [#allocation4], 1
    %s305 = scalar_lea.sflag [#allocation4], 1
    %306 = vsyncpa %s305, 1

</llo_original>
